<compile_context>
chip_gen: v5e
topology: v5e:2x2
jax: 0.10.0
libtpu: 0.0.40
codegen_flags: <defaults>
</compile_context>

<pallas_src>
from functools import partial

import jax
import jax.numpy as jnp
from jax import lax
from jax.experimental import pallas as pl
from jax.experimental.pallas import tpu as pltpu


# ---------------------------------------------------------------------------
# Kernel
# ---------------------------------------------------------------------------
def _mlp_kernel(x_ref, c_ref, o_ref, *, d_in, h1, h2, d_out):
    """Fused Linear->Tanh->Linear->Tanh->Linear on one batch tile.

    x_ref : [tile_b, d_in]                       natural (row-major) layout
    c_ref : [h1+h2+d_out+3, W] constant slab:    rows 0:h1        -> W1 [h1, d_in]
                                                 rows h1:h1+h2    -> W2 [h2, h1]
                                                 next d_out rows  -> W3 [d_out, h2]
                                                 last 3 rows      -> b1, b2, b3
    o_ref : [tile_b, d_out]
    """
    x = x_ref[...]                                        # f32 [tile_b, d_in]

    w1 = c_ref[0:h1, 0:d_in]                              # [h1, d_in]
    w2 = c_ref[h1:h1 + h2, 0:h1]                          # [h2, h1]
    w3 = c_ref[h1 + h2:h1 + h2 + d_out, 0:h2]             # [d_out, h2]
    r0 = h1 + h2 + d_out
    b1 = c_ref[r0:r0 + 1, 0:h1]                           # [1, h1] (bcast over rows)
    b2 = c_ref[r0 + 1:r0 + 2, 0:h2]                       # [1, h2]
    b3 = c_ref[r0 + 2:r0 + 3, 0:d_out]                    # [1, d_out]

    def linear(a, w, b):
        # a [tile_b, k] x w [m, k] -> [tile_b, m]; bf16 MXU operands, f32 acc.
        y = lax.dot_general(
            a.astype(jnp.bfloat16), w.astype(jnp.bfloat16),
            dimension_numbers=(((1,), (1,)), ((), ())),
            preferred_element_type=jnp.float32)
        return y + b                                       # f32 bias add (VPU)

    a1 = jnp.tanh(linear(x, w1, b1))                       # f32 tanh (EUP)
    a2 = jnp.tanh(linear(a1, w2, b2))
    o_ref[...] = linear(a2, w3, b3).astype(o_ref.dtype)


# ---------------------------------------------------------------------------
# Parameter packing (one-time layout plumbing at the caller)
# ---------------------------------------------------------------------------
def pack_connected_nn_params(params):
    """Pack PyTorch-layout weights/biases into one [h1+h2+d_out+3, W] f32 slab."""
    w1, w2, w3 = params["w1"], params["w2"], params["w3"]
    h1, d_in = w1.shape
    h2, _ = w2.shape
    d_out, _ = w3.shape
    width = max(d_in, h1, h2, d_out)

    def pad_cols(m):
        return jnp.pad(m, ((0, 0), (0, width - m.shape[1])))

    slab = jnp.concatenate(
        [pad_cols(w1),
         pad_cols(w2),
         pad_cols(w3),
         pad_cols(params["b1"].reshape(1, h1)),
         pad_cols(params["b2"].reshape(1, h2)),
         pad_cols(params["b3"].reshape(1, d_out))],
        axis=0).astype(jnp.float32)
    return slab, (d_in, h1, h2, d_out)


# ---------------------------------------------------------------------------
# Tile / grid selection
# ---------------------------------------------------------------------------
def _round_up(n, m):
    return ((n + m - 1) // m) * m


def _pick_tile_b(batch, *, max_tile=8192, two_tensorcores=None):
    """One big tile on 1-TC chips (v5e/v6e); even >=2-step grid on v7x."""
    if two_tensorcores is None:
        try:
            kind = jax.devices()[0].device_kind.lower()
        except Exception:
            kind = ""
        two_tensorcores = ("v7" in kind) or ("7x" in kind)
    steps = max(1, pl.cdiv(batch, max_tile))
    if two_tensorcores:
        steps = max(2, steps)
        steps += steps % 2             # keep grid length even for megacore
    tile_b = _round_up(pl.cdiv(batch, steps), 8)
    return min(tile_b, _round_up(batch, 8))


# ---------------------------------------------------------------------------
# Forward wrapper
# ---------------------------------------------------------------------------
def connected_nn_forward(x, const_slab, layer_dims, *, tile_b=None):
    """Fused 3-layer MLP forward pass as a single Pallas TPU kernel.

    x          : [B, d_in] float32
    const_slab : packed weights/biases from pack_connected_nn_params
    layer_dims : (d_in, h1, h2, d_out)
    returns    : [B, d_out] float32
    """
    B, d_in_x = x.shape
    d_in, h1, h2, d_out = layer_dims
    assert d_in_x == d_in

    if tile_b is None:
        tile_b = _pick_tile_b(B)
    grid = (pl.cdiv(B, tile_b),)
    rows, width = const_slab.shape

    return pl.pallas_call(
        partial(_mlp_kernel, d_in=d_in, h1=h1, h2=h2, d_out=d_out),
        out_shape=jax.ShapeDtypeStruct((B, d_out), x.dtype),
        grid_spec=pl.GridSpec(
            grid=grid,
            in_specs=[
                # x: tiled along batch (sublane) axis, natural layout.
                pl.BlockSpec((tile_b, d_in), lambda i: (i, 0)),
                # Constant slab: same (full) block every step -> VMEM resident.
                pl.BlockSpec((rows, width), lambda i: (0, 0)),
            ],
            out_specs=pl.BlockSpec((tile_b, d_out), lambda i: (i, 0)),
        ),
        compiler_params=pltpu.CompilerParams(
            dimension_semantics=("parallel",),
        ),
    )(x, const_slab)


# ---------------------------------------------------------------------------
# Reference + test harness
# ---------------------------------------------------------------------------
def _reference_forward(x, params):
    h1 = jnp.tanh(x @ params["w1"].T + params["b1"])
    h2 = jnp.tanh(h1 @ params["w2"].T + params["b2"])
    return h2 @ params["w3"].T + params["b3"]


def _init_params(key, d_in, h1, h2, d_out):
    ks = jax.random.split(key, 6)
    scale = 0.1
    return {
        # PyTorch nn.Linear layout: weight [out_features, in_features], bias [out]
        "w1": scale * jax.random.normal(ks[0], (h1, d_in), jnp.float32),
        "b1": scale * jax.random.normal(ks[1], (h1,), jnp.float32),
        "w2": scale * jax.random.normal(ks[2], (h2, h1), jnp.float32),
        "b2": scale * jax.random.normal(ks[3], (h2,), jnp.float32),
        "w3": scale * jax.random.normal(ks[4], (d_out, h2), jnp.float32),
        "b3": scale * jax.random.normal(ks[5], (d_out,), jnp.float32),
    }


if __name__ == "__main__":
    key = jax.random.PRNGKey(0)
    k_x, k_p = jax.random.split(key)

    # Surrogate MLP: in=8, hidden=32, hidden=32, out=8.
    B, D_in, H1, H2, D_out = 512, 8, 32, 32, 8

    x = jax.random.normal(k_x, (B, D_in), jnp.float32)
    params = _init_params(k_p, D_in, H1, H2, D_out)

    # One-time parameter packing (tiny; outside the per-call hot path).
    slab, dims = pack_connected_nn_params(params)

    fwd = jax.jit(partial(connected_nn_forward, layer_dims=dims))
    out = jax.block_until_ready(fwd(x, slab))

    ref = _reference_forward(x, params)
    assert out.shape == (B, D_out)
    # bf16 MXU operands with f32 accumulation -> tolerance loosened vs pure f32.
    assert jnp.allclose(out, ref, atol=2e-2, rtol=2e-2), "mismatch vs reference"

    print("KERNEL_OK")
</pallas_src>

<mosaic_0001>
module attributes {stable_mosaic.version = 11 : i64} {
  func.func @_mlp_kernel(%arg0: i32, %arg1: memref<512x8xf32, #tpu.memory_space<vmem>>, %arg2: memref<75x32xf32, #tpu.memory_space<vmem>>, %arg3: memref<512x8xf32, #tpu.memory_space<vmem>>) attributes {dimension_semantics = [#tpu.dimension_semantics<parallel>], iteration_bounds = array<i64: 1>, scalar_prefetch = 0 : i64, scratch_operands = 0 : i64, tpu.core_type = #tpu.core_type<tc>, window_params = [{transform_indices = @transform_0, window_bounds = array<i64: 512, 8>}, {pipeline_mode = #tpu.pipeline_mode<synchronous>, transform_indices = @transform_1, window_bounds = array<i64: 75, 32>}, {transform_indices = @transform_2, window_bounds = array<i64: 512, 8>}]} {
    %c0 = arith.constant 0 : index
    %c0_0 = arith.constant 0 : index
    %0 = vector.load %arg1[%c0, %c0_0] : memref<512x8xf32, #tpu.memory_space<vmem>>, vector<512x8xf32>
    %c0_1 = arith.constant 0 : index
    %c0_2 = arith.constant 0 : index
    %1 = vector.load %arg2[%c0_1, %c0_2] : memref<75x32xf32, #tpu.memory_space<vmem>>, vector<32x8xf32>
    %c32 = arith.constant 32 : index
    %c0_3 = arith.constant 0 : index
    %2 = vector.load %arg2[%c32, %c0_3] : memref<75x32xf32, #tpu.memory_space<vmem>>, vector<32x32xf32>
    %c64 = arith.constant 64 : index
    %c0_4 = arith.constant 0 : index
    %3 = vector.load %arg2[%c64, %c0_4] : memref<75x32xf32, #tpu.memory_space<vmem>>, vector<8x32xf32>
    %c72 = arith.constant 72 : index
    %c0_5 = arith.constant 0 : index
    %4 = vector.load %arg2[%c72, %c0_5] : memref<75x32xf32, #tpu.memory_space<vmem>>, vector<1x32xf32>
    %c73 = arith.constant 73 : index
    %c0_6 = arith.constant 0 : index
    %5 = vector.load %arg2[%c73, %c0_6] : memref<75x32xf32, #tpu.memory_space<vmem>>, vector<1x32xf32>
    %c74 = arith.constant 74 : index
    %c0_7 = arith.constant 0 : index
    %6 = vector.load %arg2[%c74, %c0_7] : memref<75x32xf32, #tpu.memory_space<vmem>>, vector<1x8xf32>
    %7 = arith.truncf %0 : vector<512x8xf32> to vector<512x8xbf16>
    %8 = arith.truncf %1 : vector<32x8xf32> to vector<32x8xbf16>
    %cst = arith.constant dense<0.000000e+00> : vector<512x32xf32>
    %9 = tpu.matmul %7, %8, %cst {dimension_numbers = #tpu.dot_dimension_numbers<[1], [1], [0], [0], [0, 0, 1, 0], [], []>} : vector<512x8xbf16>, vector<32x8xbf16>, vector<512x32xf32> -> vector<512x32xf32>
    %10 = vector.broadcast %4 : vector<1x32xf32> to vector<512x32xf32>
    %11 = arith.addf %9, %10 : vector<512x32xf32>
    %12 = math.tanh %11 : vector<512x32xf32>
    %13 = arith.truncf %12 : vector<512x32xf32> to vector<512x32xbf16>
    %14 = arith.truncf %2 : vector<32x32xf32> to vector<32x32xbf16>
    %cst_8 = arith.constant dense<0.000000e+00> : vector<512x32xf32>
    %15 = tpu.matmul %13, %14, %cst_8 {dimension_numbers = #tpu.dot_dimension_numbers<[1], [1], [0], [0], [0, 0, 1, 0], [], []>} : vector<512x32xbf16>, vector<32x32xbf16>, vector<512x32xf32> -> vector<512x32xf32>
    %16 = vector.broadcast %5 : vector<1x32xf32> to vector<512x32xf32>
    %17 = arith.addf %15, %16 : vector<512x32xf32>
    %18 = math.tanh %17 : vector<512x32xf32>
    %19 = arith.truncf %18 : vector<512x32xf32> to vector<512x32xbf16>
    %20 = arith.truncf %3 : vector<8x32xf32> to vector<8x32xbf16>
    %cst_9 = arith.constant dense<0.000000e+00> : vector<512x8xf32>
    %21 = tpu.matmul %19, %20, %cst_9 {dimension_numbers = #tpu.dot_dimension_numbers<[1], [1], [0], [0], [0, 0, 1, 0], [], []>} : vector<512x32xbf16>, vector<8x32xbf16>, vector<512x8xf32> -> vector<512x8xf32>
    %22 = vector.broadcast %6 : vector<1x8xf32> to vector<512x8xf32>
    %23 = arith.addf %21, %22 : vector<512x8xf32>
    %c0_10 = arith.constant 0 : index
    %c0_11 = arith.constant 0 : index
    %24 = vector.load %arg3[%c0_10, %c0_11] : memref<512x8xf32, #tpu.memory_space<vmem>>, vector<512x8xf32>
    tpu.vector_store %arg3[%c0_10, %c0_11], %23 {strides = array<i32>} : memref<512x8xf32, #tpu.memory_space<vmem>>, vector<512x8xf32>,
    return
  }
  func.func @transform_0(%arg0: i32) -> (i32, i32) {
    %c0_i32 = arith.constant 0 : i32
    %c0_i32_0 = arith.constant 0 : i32
    return %arg0, %c0_i32 : i32, i32
  }
  func.func @transform_1(%arg0: i32) -> (i32, i32) {
    %c0_i32 = arith.constant 0 : i32
    %c0_i32_0 = arith.constant 0 : i32
    %c0_i32_1 = arith.constant 0 : i32
    return %c0_i32, %c0_i32_0 : i32, i32
  }
  func.func @transform_2(%arg0: i32) -> (i32, i32) {
    %c0_i32 = arith.constant 0 : i32
    %c0_i32_0 = arith.constant 0 : i32
    return %arg0, %c0_i32 : i32, i32
  }
}

</mosaic_0001>

<llo_original>
// kernel: connected_nn_forward.1
$region0: #{connected_nn_forward.1}
  #allocation0 [shape = 'u32[]', space=smem, size = 0x4, offset = 0x4, fixed_abs, tag = 'smem constant byte address 0x4 - core index']
  #allocation1 [shape = 'u32[72,128]{1,0:T(1,128)}', space=vmem, size = 0x9000, scoped, tag = 'internal scratch']
  %s0 = inlined_call_operand.vmem [shape: f32[512,8], index: 0, kind: input, shape index: {}]
  %s1 = inlined_call_operand.vmem [shape: f32[75,32], index: 1, kind: input, shape index: {}]
  %s2 = inlined_call_operand.vmem [shape: f32[512,8], index: 2, kind: output, shape index: {}]
  %s3 = sld [smem:[#allocation0]]
  $region18: #{connected_nn_forward.1} parent=0
    _
  %s5 = ssub.s32 1, %s3
  %s6 = scalar_select 0, %s5, %s3
  // Predicated region
  $region2: #{connected_nn_forward.1} parent=0 // pred_check
    _
  $region3: #{connected_nn_forward.1} parent=0 // pred_check_branch
    %8 = sbr.rel (0) target = $region5
  $region4: #{connected_nn_forward.1} parent=0 // pred_region
    _
  $region5: #{connected_nn_forward.1} parent=0 // pred_fallthru
    _
  // Predicated region
  $region6: #{connected_nn_forward.1} parent=0 // pred_check
    _
  $region7: #{connected_nn_forward.1} parent=0 // pred_check_branch
    %10 = sbr.rel (0) target = $region9
  $region8: #{connected_nn_forward.1} parent=0 // pred_region
    _
  $region9: #{connected_nn_forward.1} parent=0 // pred_fallthru
    _
  %v12 = vld [vmem:[%s0] sm:$0xff]
  %v13 = vld [vmem:[%s0 + $0x8] sm:$0xff]
  %v14 = vld [vmem:[%s0 + $0x10] sm:$0xff]
  %v15 = vld [vmem:[%s0 + $0x18] sm:$0xff]
  %v16 = vld [vmem:[%s0 + $0x20] sm:$0xff]
  %v17 = vld [vmem:[%s0 + $0x28] sm:$0xff]
  %v18 = vld [vmem:[%s0 + $0x30] sm:$0xff]
  %v19 = vld [vmem:[%s0 + $0x38] sm:$0xff]
  %v20 = vld [vmem:[%s0 + $0x40] sm:$0xff]
  %v21 = vld [vmem:[%s0 + $0x48] sm:$0xff]
  %v22 = vld [vmem:[%s0 + $0x50] sm:$0xff]
  %v23 = vld [vmem:[%s0 + $0x58] sm:$0xff]
  %v24 = vld [vmem:[%s0 + $0x60] sm:$0xff]
  %v25 = vld [vmem:[%s0 + $0x68] sm:$0xff]
  %v26 = vld [vmem:[%s0 + $0x70] sm:$0xff]
  %v27 = vld [vmem:[%s0 + $0x78] sm:$0xff]
  %v28 = vld [vmem:[%s0 + $0x80] sm:$0xff]
  %v29 = vld [vmem:[%s0 + $0x88] sm:$0xff]
  %v30 = vld [vmem:[%s0 + $0x90] sm:$0xff]
  %v31 = vld [vmem:[%s0 + $0x98] sm:$0xff]
  %v32 = vld [vmem:[%s0 + $0xa0] sm:$0xff]
  %v33 = vld [vmem:[%s0 + $0xa8] sm:$0xff]
  %v34 = vld [vmem:[%s0 + $0xb0] sm:$0xff]
  %v35 = vld [vmem:[%s0 + $0xb8] sm:$0xff]
  %v36 = vld [vmem:[%s0 + $0xc0] sm:$0xff]
  %v37 = vld [vmem:[%s0 + $0xc8] sm:$0xff]
  %v38 = vld [vmem:[%s0 + $0xd0] sm:$0xff]
  %v39 = vld [vmem:[%s0 + $0xd8] sm:$0xff]
  %v40 = vld [vmem:[%s0 + $0xe0] sm:$0xff]
  %v41 = vld [vmem:[%s0 + $0xe8] sm:$0xff]
  %v42 = vld [vmem:[%s0 + $0xf0] sm:$0xff]
  %v43 = vld [vmem:[%s0 + $0xf8] sm:$0xff]
  %v44 = vld [vmem:[%s0 + $0x100] sm:$0xff]
  %v45 = vld [vmem:[%s0 + $0x108] sm:$0xff]
  %v46 = vld [vmem:[%s0 + $0x110] sm:$0xff]
  %v47 = vld [vmem:[%s0 + $0x118] sm:$0xff]
  %v48 = vld [vmem:[%s0 + $0x120] sm:$0xff]
  %v49 = vld [vmem:[%s0 + $0x128] sm:$0xff]
  %v50 = vld [vmem:[%s0 + $0x130] sm:$0xff]
  %v51 = vld [vmem:[%s0 + $0x138] sm:$0xff]
  %v52 = vld [vmem:[%s0 + $0x140] sm:$0xff]
  %v53 = vld [vmem:[%s0 + $0x148] sm:$0xff]
  %v54 = vld [vmem:[%s0 + $0x150] sm:$0xff]
  %v55 = vld [vmem:[%s0 + $0x158] sm:$0xff]
  %v56 = vld [vmem:[%s0 + $0x160] sm:$0xff]
  %v57 = vld [vmem:[%s0 + $0x168] sm:$0xff]
  %v58 = vld [vmem:[%s0 + $0x170] sm:$0xff]
  %v59 = vld [vmem:[%s0 + $0x178] sm:$0xff]
  %v60 = vld [vmem:[%s0 + $0x180] sm:$0xff]
  %v61 = vld [vmem:[%s0 + $0x188] sm:$0xff]
  %v62 = vld [vmem:[%s0 + $0x190] sm:$0xff]
  %v63 = vld [vmem:[%s0 + $0x198] sm:$0xff]
  %v64 = vld [vmem:[%s0 + $0x1a0] sm:$0xff]
  %v65 = vld [vmem:[%s0 + $0x1a8] sm:$0xff]
  %v66 = vld [vmem:[%s0 + $0x1b0] sm:$0xff]
  %v67 = vld [vmem:[%s0 + $0x1b8] sm:$0xff]
  %v68 = vld [vmem:[%s0 + $0x1c0] sm:$0xff]
  %v69 = vld [vmem:[%s0 + $0x1c8] sm:$0xff]
  %v70 = vld [vmem:[%s0 + $0x1d0] sm:$0xff]
  %v71 = vld [vmem:[%s0 + $0x1d8] sm:$0xff]
  %v72 = vld [vmem:[%s0 + $0x1e0] sm:$0xff]
  %v73 = vld [vmem:[%s0 + $0x1e8] sm:$0xff]
  %v74 = vld [vmem:[%s0 + $0x1f0] sm:$0xff]
  %v75 = vld [vmem:[%s0 + $0x1f8] sm:$0xff]
  %v76 = vld [vmem:[%s1] sm:$0xff]
  %v77 = vld [vmem:[%s1 + $0x8] sm:$0xff]
  %v78 = vld [vmem:[%s1 + $0x10] sm:$0xff]
  %v79 = vld [vmem:[%s1 + $0x18] sm:$0xff]
  %v80 = vld [vmem:[%s1 + $0x20] sm:$0xff]
  %v81 = vld [vmem:[%s1 + $0x28] sm:$0xff]
  %v82 = vld [vmem:[%s1 + $0x30] sm:$0xff]
  %v83 = vld [vmem:[%s1 + $0x38] sm:$0xff]
  %v84 = vld [vmem:[%s1 + $0x40] sm:$0xff]
  %v85 = vld [vmem:[%s1 + $0x48] sm:$0x1]
  %v86 = vld [vmem:[%s1 + $0x49] sm:$0x1]
  %v87 = vld [vmem:[%s1 + $0x4a] sm:$0x1]
  %v88 = vpack.c.bf16 %v13, %v12
  %v89 = vpack.c.bf16 %v15, %v14
  %v90 = vpack.c.bf16 %v17, %v16
  %v91 = vpack.c.bf16 %v19, %v18
  %v92 = vpack.c.bf16 %v21, %v20
  %v93 = vpack.c.bf16 %v23, %v22
  %v94 = vpack.c.bf16 %v25, %v24
  %v95 = vpack.c.bf16 %v27, %v26
  %v96 = vpack.c.bf16 %v29, %v28
  %v97 = vpack.c.bf16 %v31, %v30
  %v98 = vpack.c.bf16 %v33, %v32
  %v99 = vpack.c.bf16 %v35, %v34
  %v100 = vpack.c.bf16 %v37, %v36
  %v101 = vpack.c.bf16 %v39, %v38
  %v102 = vpack.c.bf16 %v41, %v40
  %v103 = vpack.c.bf16 %v43, %v42
  %v104 = vpack.c.bf16 %v45, %v44
  %v105 = vpack.c.bf16 %v47, %v46
  %v106 = vpack.c.bf16 %v49, %v48
  %v107 = vpack.c.bf16 %v51, %v50
  %v108 = vpack.c.bf16 %v53, %v52
  %v109 = vpack.c.bf16 %v55, %v54
  %v110 = vpack.c.bf16 %v57, %v56
  %v111 = vpack.c.bf16 %v59, %v58
  %v112 = vpack.c.bf16 %v61, %v60
  %v113 = vpack.c.bf16 %v63, %v62
  %v114 = vpack.c.bf16 %v65, %v64
  %v115 = vpack.c.bf16 %v67, %v66
  %v116 = vpack.c.bf16 %v69, %v68
  %v117 = vpack.c.bf16 %v71, %v70
  %v118 = vpack.c.bf16 %v73, %v72
  %v119 = vpack.c.bf16 %v75, %v74
  %v120 = vpack.c.bf16 %v77, %v76
  %v121 = vpack.c.bf16 %v79, %v78
  %v122 = vperm.slane %v85, 0
  %vm123 = vcmask 64512
  %v125 = vsel %vm123, %v88, 0
  %v128 = vsel %vm123, %v89, 0
  %v131 = vsel %vm123, %v90, 0
  %v134 = vsel %vm123, %v91, 0
  %v137 = vsel %vm123, %v92, 0
  %v140 = vsel %vm123, %v93, 0
  %v143 = vsel %vm123, %v94, 0
  %v146 = vsel %vm123, %v95, 0
  %v149 = vsel %vm123, %v96, 0
  %v152 = vsel %vm123, %v97, 0
  %v155 = vsel %vm123, %v98, 0
  %v158 = vsel %vm123, %v99, 0
  %v161 = vsel %vm123, %v100, 0
  %v164 = vsel %vm123, %v101, 0
  %v167 = vsel %vm123, %v102, 0
  %v170 = vsel %vm123, %v103, 0
  %v173 = vsel %vm123, %v104, 0
  %v176 = vsel %vm123, %v105, 0
  %v179 = vsel %vm123, %v106, 0
  %v182 = vsel %vm123, %v107, 0
  %v185 = vsel %vm123, %v108, 0
  %v188 = vsel %vm123, %v109, 0
  %v191 = vsel %vm123, %v110, 0
  %v194 = vsel %vm123, %v111, 0
  %v197 = vsel %vm123, %v112, 0
  %v200 = vsel %vm123, %v113, 0
  %v203 = vsel %vm123, %v114, 0
  %v206 = vsel %vm123, %v115, 0
  %v209 = vsel %vm123, %v116, 0
  %v212 = vsel %vm123, %v117, 0
  %v215 = vsel %vm123, %v118, 0
  %v218 = vsel %vm123, %v119, 0
  %v221 = vsel %vm123, %v120, 0
  %v224 = vsel %vm123, %v121, 0
  %226 = vmatpush.bf16.xpose.msra.mxu0 0
  %227 = vmatpush.bf16.xpose.msra.mxu0 0
  %228 = vmatpush.bf16.xpose.msra.mxu0 0
  %229 = vmatpush.bf16.xpose.msra.mxu0 0
  %230 = vmatpush.bf16.xpose.msra.mxu0 0
  %231 = vmatpush.bf16.xpose.msra.mxu0 0
  %232 = vmatpush.bf16.xpose.msra.mxu0 %v224
  %233 = vmatpush.bf16.xpose.msra.mxu0 %v221
  %234 = vmatmul.bf16.gmra.mxu0 %v125
  %v235 = vpop.f32.mrf.mxu0
  %v236 = vadd.f32 %v122, %v235
  %v237 = vpop.f32.mrf.mxu0
  %v238 = vadd.f32 %v122, %v237
  %239 = vmatmul.bf16.gmra.mxu0 %v128
  %v240 = vpop.f32.mrf.mxu0
  %v241 = vadd.f32 %v122, %v240
  %v242 = vpop.f32.mrf.mxu0
  %v243 = vadd.f32 %v122, %v242
  %244 = vmatmul.bf16.gmra.mxu0 %v131
  %v245 = vpop.f32.mrf.mxu0
  %v246 = vadd.f32 %v122, %v245
  %v247 = vpop.f32.mrf.mxu0
  %v248 = vadd.f32 %v122, %v247
  %249 = vmatmul.bf16.gmra.mxu0 %v134
  %v250 = vpop.f32.mrf.mxu0
  %v251 = vadd.f32 %v122, %v250
  %v252 = vpop.f32.mrf.mxu0
  %v253 = vadd.f32 %v122, %v252
  %254 = vmatmul.bf16.gmra.mxu0 %v137
  %v255 = vpop.f32.mrf.mxu0
  %v256 = vadd.f32 %v122, %v255
  %v257 = vpop.f32.mrf.mxu0
  %v258 = vadd.f32 %v122, %v257
  %259 = vmatmul.bf16.gmra.mxu0 %v140
  %v260 = vpop.f32.mrf.mxu0
  %v261 = vadd.f32 %v122, %v260
  %v262 = vpop.f32.mrf.mxu0
  %v263 = vadd.f32 %v122, %v262
  %264 = vmatmul.bf16.gmra.mxu0 %v143
  %v265 = vpop.f32.mrf.mxu0
  %v266 = vadd.f32 %v122, %v265
  %v267 = vpop.f32.mrf.mxu0
  %v268 = vadd.f32 %v122, %v267
  %269 = vmatmul.bf16.gmra.mxu0 %v146
  %v270 = vpop.f32.mrf.mxu0
  %v271 = vadd.f32 %v122, %v270
  %v272 = vpop.f32.mrf.mxu0
  %v273 = vadd.f32 %v122, %v272
  %274 = vmatmul.bf16.gmra.mxu0 %v149
  %v275 = vpop.f32.mrf.mxu0
  %v276 = vadd.f32 %v122, %v275
  %v277 = vpop.f32.mrf.mxu0
  %v278 = vadd.f32 %v122, %v277
  %279 = vmatmul.bf16.gmra.mxu0 %v152
  %v280 = vpop.f32.mrf.mxu0
  %v281 = vadd.f32 %v122, %v280
  %v282 = vpop.f32.mrf.mxu0
  %v283 = vadd.f32 %v122, %v282
  %284 = vmatmul.bf16.gmra.mxu0 %v155
  %v285 = vpop.f32.mrf.mxu0
  %v286 = vadd.f32 %v122, %v285
  %v287 = vpop.f32.mrf.mxu0
  %v288 = vadd.f32 %v122, %v287
  %289 = vmatmul.bf16.gmra.mxu0 %v158
  %v290 = vpop.f32.mrf.mxu0
  %v291 = vadd.f32 %v122, %v290
  %v292 = vpop.f32.mrf.mxu0
  %v293 = vadd.f32 %v122, %v292
  %294 = vmatmul.bf16.gmra.mxu0 %v161
  %v295 = vpop.f32.mrf.mxu0
  %v296 = vadd.f32 %v122, %v295
  %v297 = vpop.f32.mrf.mxu0
  %v298 = vadd.f32 %v122, %v297
  %299 = vmatmul.bf16.gmra.mxu0 %v164
  %v300 = vpop.f32.mrf.mxu0
  %v301 = vadd.f32 %v122, %v300
  %v302 = vpop.f32.mrf.mxu0
  %v303 = vadd.f32 %v122, %v302
  %304 = vmatmul.bf16.gmra.mxu0 %v167
  %v305 = vpop.f32.mrf.mxu0
  %v306 = vadd.f32 %v122, %v305
  %v307 = vpop.f32.mrf.mxu0
  %v308 = vadd.f32 %v122, %v307
  %309 = vmatmul.bf16.gmra.mxu0 %v170
  %v310 = vpop.f32.mrf.mxu0
  %v311 = vadd.f32 %v122, %v310
  %v312 = vpop.f32.mrf.mxu0
  %v313 = vadd.f32 %v122, %v312
  %314 = vmatmul.bf16.gmra.mxu0 %v173
  %v315 = vpop.f32.mrf.mxu0
  %v316 = vadd.f32 %v122, %v315
  %v317 = vpop.f32.mrf.mxu0
  %v318 = vadd.f32 %v122, %v317
  %319 = vmatmul.bf16.gmra.mxu0 %v176
  %v320 = vpop.f32.mrf.mxu0
  %v321 = vadd.f32 %v122, %v320
  %v322 = vpop.f32.mrf.mxu0
  %v323 = vadd.f32 %v122, %v322
  %324 = vmatmul.bf16.gmra.mxu0 %v179
  %v325 = vpop.f32.mrf.mxu0
  %v326 = vadd.f32 %v122, %v325
  %v327 = vpop.f32.mrf.mxu0
  %v328 = vadd.f32 %v122, %v327
  %329 = vmatmul.bf16.gmra.mxu0 %v182
  %v330 = vpop.f32.mrf.mxu0
  %v331 = vadd.f32 %v122, %v330
  %v332 = vpop.f32.mrf.mxu0
  %v333 = vadd.f32 %v122, %v332
  %334 = vmatmul.bf16.gmra.mxu0 %v185
  %v335 = vpop.f32.mrf.mxu0
  %v336 = vadd.f32 %v122, %v335
  %v337 = vpop.f32.mrf.mxu0
  %v338 = vadd.f32 %v122, %v337
  %339 = vmatmul.bf16.gmra.mxu0 %v188
  %v340 = vpop.f32.mrf.mxu0
  %v341 = vadd.f32 %v122, %v340
  %v342 = vpop.f32.mrf.mxu0
  %v343 = vadd.f32 %v122, %v342
  %344 = vmatmul.bf16.gmra.mxu0 %v191
  %v345 = vpop.f32.mrf.mxu0
  %v346 = vadd.f32 %v122, %v345
  %v347 = vpop.f32.mrf.mxu0
  %v348 = vadd.f32 %v122, %v347
  %349 = vmatmul.bf16.gmra.mxu0 %v194
  %v350 = vpop.f32.mrf.mxu0
  %v351 = vadd.f32 %v122, %v350
  %v352 = vpop.f32.mrf.mxu0
  %v353 = vadd.f32 %v122, %v352
  %354 = vmatmul.bf16.gmra.mxu0 %v197
  %v355 = vpop.f32.mrf.mxu0
  %v356 = vadd.f32 %v122, %v355
  %v357 = vpop.f32.mrf.mxu0
  %v358 = vadd.f32 %v122, %v357
  %359 = vmatmul.bf16.gmra.mxu0 %v200
  %v360 = vpop.f32.mrf.mxu0
  %v361 = vadd.f32 %v122, %v360
  %v362 = vpop.f32.mrf.mxu0
  %v363 = vadd.f32 %v122, %v362
  %364 = vmatmul.bf16.gmra.mxu0 %v203
  %v365 = vpop.f32.mrf.mxu0
  %v366 = vadd.f32 %v122, %v365
  %v367 = vpop.f32.mrf.mxu0
  %v368 = vadd.f32 %v122, %v367
  %369 = vmatmul.bf16.gmra.mxu0 %v206
  %v370 = vpop.f32.mrf.mxu0
  %v371 = vadd.f32 %v122, %v370
  %v372 = vpop.f32.mrf.mxu0
  %v373 = vadd.f32 %v122, %v372
  %374 = vmatmul.bf16.gmra.mxu0 %v209
  %v375 = vpop.f32.mrf.mxu0
  %v376 = vadd.f32 %v122, %v375
  %v377 = vpop.f32.mrf.mxu0
  %v378 = vadd.f32 %v122, %v377
  %379 = vmatmul.bf16.gmra.mxu0 %v212
  %v380 = vpop.f32.mrf.mxu0
  %v381 = vadd.f32 %v122, %v380
  %v382 = vpop.f32.mrf.mxu0
  %v383 = vadd.f32 %v122, %v382
  %384 = vmatmul.bf16.gmra.mxu0 %v215
  %v385 = vpop.f32.mrf.mxu0
  %v386 = vadd.f32 %v122, %v385
  %v387 = vpop.f32.mrf.mxu0
  %v388 = vadd.f32 %v122, %v387
  %389 = vmatmul.bf16.gmra.mxu0 %v218
  %v390 = vpop.f32.mrf.mxu0
  %v391 = vadd.f32 %v122, %v390
  %v392 = vpop.f32.mrf.mxu0
  %v393 = vadd.f32 %v122, %v392
  %394 = vdwg.mxu0
  %v395 = vtanh.pop %v236
  %v396 = vtanh.pop %v238
  %v397 = vtanh.pop %v241
  %v398 = vtanh.pop %v243
  %v399 = vtanh.pop %v246
  %v400 = vtanh.pop %v248
  %v401 = vtanh.pop %v251
  %v402 = vtanh.pop %v253
  %v403 = vtanh.pop %v256
  %v404 = vtanh.pop %v258
  %v405 = vtanh.pop %v261
  %v406 = vtanh.pop %v263
  %v407 = vtanh.pop %v266
  %v408 = vtanh.pop %v268
  %v409 = vtanh.pop %v271
  %v410 = vtanh.pop %v273
  %v411 = vtanh.pop %v276
  %v412 = vtanh.pop %v278
  %v413 = vtanh.pop %v281
  %v414 = vtanh.pop %v283
  %v415 = vtanh.pop %v286
  %v416 = vtanh.pop %v288
  %v417 = vtanh.pop %v291
  %v418 = vtanh.pop %v293
  %v419 = vtanh.pop %v296
  %v420 = vtanh.pop %v298
  %v421 = vtanh.pop %v301
  %v422 = vtanh.pop %v303
  %v423 = vtanh.pop %v306
  %v424 = vtanh.pop %v308
  %v425 = vtanh.pop %v311
  %v426 = vtanh.pop %v313
  %v427 = vtanh.pop %v316
  %v428 = vtanh.pop %v318
  %v429 = vtanh.pop %v321
  %v430 = vtanh.pop %v323
  %v431 = vtanh.pop %v326
  %v432 = vtanh.pop %v328
  %v433 = vtanh.pop %v331
  %v434 = vtanh.pop %v333
  %v435 = vtanh.pop %v336
  %v436 = vtanh.pop %v338
  %v437 = vtanh.pop %v341
  %v438 = vtanh.pop %v343
  %v439 = vtanh.pop %v346
  %v440 = vtanh.pop %v348
  %v441 = vtanh.pop %v351
  %v442 = vtanh.pop %v353
  %v443 = vtanh.pop %v356
  %v444 = vtanh.pop %v358
  %v445 = vtanh.pop %v361
  %v446 = vtanh.pop %v363
  %v447 = vtanh.pop %v366
  %v448 = vtanh.pop %v368
  %v449 = vtanh.pop %v371
  %v450 = vtanh.pop %v373
  %v451 = vtanh.pop %v376
  %v452 = vtanh.pop %v378
  %v453 = vtanh.pop %v381
  %v454 = vtanh.pop %v383
  %v455 = vtanh.pop %v386
  %v456 = vtanh.pop %v388
  %v457 = vtanh.pop %v391
  %v458 = vtanh.pop %v393
  %v459 = vpack.c.bf16 %v396, %v395
  %v460 = vpack.c.bf16 %v398, %v397
  %v461 = vpack.c.bf16 %v400, %v399
  %v462 = vpack.c.bf16 %v402, %v401
  %v463 = vpack.c.bf16 %v404, %v403
  %v464 = vpack.c.bf16 %v406, %v405
  %v465 = vpack.c.bf16 %v408, %v407
  %v466 = vpack.c.bf16 %v410, %v409
  %v467 = vpack.c.bf16 %v412, %v411
  %v468 = vpack.c.bf16 %v414, %v413
  %v469 = vpack.c.bf16 %v416, %v415
  %v470 = vpack.c.bf16 %v418, %v417
  %v471 = vpack.c.bf16 %v420, %v419
  %v472 = vpack.c.bf16 %v422, %v421
  %v473 = vpack.c.bf16 %v424, %v423
  %v474 = vpack.c.bf16 %v426, %v425
  %v475 = vpack.c.bf16 %v428, %v427
  %v476 = vpack.c.bf16 %v430, %v429
  %v477 = vpack.c.bf16 %v432, %v431
  %v478 = vpack.c.bf16 %v434, %v433
  %v479 = vpack.c.bf16 %v436, %v435
  %v480 = vpack.c.bf16 %v438, %v437
  %v481 = vpack.c.bf16 %v440, %v439
  %v482 = vpack.c.bf16 %v442, %v441
  %v483 = vpack.c.bf16 %v444, %v443
  %v484 = vpack.c.bf16 %v446, %v445
  %v485 = vpack.c.bf16 %v448, %v447
  %v486 = vpack.c.bf16 %v450, %v449
  %v487 = vpack.c.bf16 %v452, %v451
  %v488 = vpack.c.bf16 %v454, %v453
  %v489 = vpack.c.bf16 %v456, %v455
  %v490 = vpack.c.bf16 %v458, %v457
  %v491 = vpack.c.bf16 %v81, %v80
  %v492 = vpack.c.bf16 %v83, %v82
  %v493 = vperm.slane %v86, 0
  %vm494 = vcmask 261120
  %v496 = vsel %vm494, %v459, 0
  %v499 = vsel %vm494, %v460, 0
  %v502 = vsel %vm494, %v461, 0
  %v505 = vsel %vm494, %v462, 0
  %v508 = vsel %vm494, %v463, 0
  %v511 = vsel %vm494, %v464, 0
  %v514 = vsel %vm494, %v465, 0
  %v517 = vsel %vm494, %v466, 0
  %v520 = vsel %vm494, %v467, 0
  %v523 = vsel %vm494, %v468, 0
  %v526 = vsel %vm494, %v469, 0
  %v529 = vsel %vm494, %v470, 0
  %v532 = vsel %vm494, %v471, 0
  %v535 = vsel %vm494, %v472, 0
  %v538 = vsel %vm494, %v473, 0
  %v541 = vsel %vm494, %v474, 0
  %v544 = vsel %vm494, %v475, 0
  %v547 = vsel %vm494, %v476, 0
  %v550 = vsel %vm494, %v477, 0
  %v553 = vsel %vm494, %v478, 0
  %v556 = vsel %vm494, %v479, 0
  %v559 = vsel %vm494, %v480, 0
  %v562 = vsel %vm494, %v481, 0
  %v565 = vsel %vm494, %v482, 0
  %v568 = vsel %vm494, %v483, 0
  %v571 = vsel %vm494, %v484, 0
  %v574 = vsel %vm494, %v485, 0
  %v577 = vsel %vm494, %v486, 0
  %v580 = vsel %vm494, %v487, 0
  %v583 = vsel %vm494, %v488, 0
  %v586 = vsel %vm494, %v489, 0
  %v589 = vsel %vm494, %v490, 0
  %v592 = vsel %vm494, %v491, 0
  %v595 = vsel %vm494, %v492, 0
  %597 = vmatpush.bf16.xpose.msra.mxu0 0
  %598 = vmatpush.bf16.xpose.msra.mxu0 0
  %599 = vmatpush.bf16.xpose.msra.mxu0 0
  %600 = vmatpush.bf16.xpose.msra.mxu0 0
  %601 = vmatpush.bf16.xpose.msra.mxu0 0
  %602 = vmatpush.bf16.xpose.msra.mxu0 0
  %603 = vmatpush.bf16.xpose.msra.mxu0 %v595
  %604 = vmatpush.bf16.xpose.msra.mxu0 %v592
  %605 = vmatmul.bf16.gmra.mxu0 %v496
  %v606 = vpop.f32.mrf.mxu0
  %v607 = vadd.f32 %v493, %v606
  %v608 = vpop.f32.mrf.mxu0
  %v609 = vadd.f32 %v493, %v608
  %610 = vmatmul.bf16.gmra.mxu0 %v499
  %v611 = vpop.f32.mrf.mxu0
  %v612 = vadd.f32 %v493, %v611
  %v613 = vpop.f32.mrf.mxu0
  %v614 = vadd.f32 %v493, %v613
  %615 = vmatmul.bf16.gmra.mxu0 %v502
  %v616 = vpop.f32.mrf.mxu0
  %v617 = vadd.f32 %v493, %v616
  %v618 = vpop.f32.mrf.mxu0
  %v619 = vadd.f32 %v493, %v618
  %620 = vmatmul.bf16.gmra.mxu0 %v505
  %v621 = vpop.f32.mrf.mxu0
  %v622 = vadd.f32 %v493, %v621
  %v623 = vpop.f32.mrf.mxu0
  %v624 = vadd.f32 %v493, %v623
  %625 = vmatmul.bf16.gmra.mxu0 %v508
  %v626 = vpop.f32.mrf.mxu0
  %v627 = vadd.f32 %v493, %v626
  %v628 = vpop.f32.mrf.mxu0
  %v629 = vadd.f32 %v493, %v628
  %630 = vmatmul.bf16.gmra.mxu0 %v511
  %v631 = vpop.f32.mrf.mxu0
  %v632 = vadd.f32 %v493, %v631
  %v633 = vpop.f32.mrf.mxu0
  %v634 = vadd.f32 %v493, %v633
  %635 = vmatmul.bf16.gmra.mxu0 %v514
  %v636 = vpop.f32.mrf.mxu0
  %v637 = vadd.f32 %v493, %v636
  %v638 = vpop.f32.mrf.mxu0
  %v639 = vadd.f32 %v493, %v638
  %640 = vmatmul.bf16.gmra.mxu0 %v517
  %v641 = vpop.f32.mrf.mxu0
  %v642 = vadd.f32 %v493, %v641
  %v643 = vpop.f32.mrf.mxu0
  %v644 = vadd.f32 %v493, %v643
  %645 = vmatmul.bf16.gmra.mxu0 %v520
  %v646 = vpop.f32.mrf.mxu0
  %v647 = vadd.f32 %v493, %v646
  %v648 = vpop.f32.mrf.mxu0
  %v649 = vadd.f32 %v493, %v648
  %650 = vmatmul.bf16.gmra.mxu0 %v523
  %v651 = vpop.f32.mrf.mxu0
  %v652 = vadd.f32 %v493, %v651
  %v653 = vpop.f32.mrf.mxu0
  %v654 = vadd.f32 %v493, %v653
  %655 = vmatmul.bf16.gmra.mxu0 %v526
  %v656 = vpop.f32.mrf.mxu0
  %v657 = vadd.f32 %v493, %v656
  %v658 = vpop.f32.mrf.mxu0
  %v659 = vadd.f32 %v493, %v658
  %660 = vmatmul.bf16.gmra.mxu0 %v529
  %v661 = vpop.f32.mrf.mxu0
  %v662 = vadd.f32 %v493, %v661
  %v663 = vpop.f32.mrf.mxu0
  %v664 = vadd.f32 %v493, %v663
  %665 = vmatmul.bf16.gmra.mxu0 %v532
  %v666 = vpop.f32.mrf.mxu0
  %v667 = vadd.f32 %v493, %v666
  %v668 = vpop.f32.mrf.mxu0
  %v669 = vadd.f32 %v493, %v668
  %670 = vmatmul.bf16.gmra.mxu0 %v535
  %v671 = vpop.f32.mrf.mxu0
  %v672 = vadd.f32 %v493, %v671
  %v673 = vpop.f32.mrf.mxu0
  %v674 = vadd.f32 %v493, %v673
  %675 = vmatmul.bf16.gmra.mxu0 %v538
  %v676 = vpop.f32.mrf.mxu0
  %v677 = vadd.f32 %v493, %v676
  %v678 = vpop.f32.mrf.mxu0
  %v679 = vadd.f32 %v493, %v678
  %680 = vmatmul.bf16.gmra.mxu0 %v541
  %v681 = vpop.f32.mrf.mxu0
  %v682 = vadd.f32 %v493, %v681
  %v683 = vpop.f32.mrf.mxu0
  %v684 = vadd.f32 %v493, %v683
  %685 = vmatmul.bf16.gmra.mxu0 %v544
  %v686 = vpop.f32.mrf.mxu0
  %v687 = vadd.f32 %v493, %v686
  %v688 = vpop.f32.mrf.mxu0
  %v689 = vadd.f32 %v493, %v688
  %690 = vmatmul.bf16.gmra.mxu0 %v547
  %v691 = vpop.f32.mrf.mxu0
  %v692 = vadd.f32 %v493, %v691
  %v693 = vpop.f32.mrf.mxu0
  %v694 = vadd.f32 %v493, %v693
  %695 = vmatmul.bf16.gmra.mxu0 %v550
  %v696 = vpop.f32.mrf.mxu0
  %v697 = vadd.f32 %v493, %v696
  %v698 = vpop.f32.mrf.mxu0
  %v699 = vadd.f32 %v493, %v698
  %700 = vmatmul.bf16.gmra.mxu0 %v553
  %v701 = vpop.f32.mrf.mxu0
  %v702 = vadd.f32 %v493, %v701
  %v703 = vpop.f32.mrf.mxu0
  %v704 = vadd.f32 %v493, %v703
  %705 = vmatmul.bf16.gmra.mxu0 %v556
  %v706 = vpop.f32.mrf.mxu0
  %v707 = vadd.f32 %v493, %v706
  %v708 = vpop.f32.mrf.mxu0
  %v709 = vadd.f32 %v493, %v708
  %710 = vmatmul.bf16.gmra.mxu0 %v559
  %v711 = vpop.f32.mrf.mxu0
  %v712 = vadd.f32 %v493, %v711
  %v713 = vpop.f32.mrf.mxu0
  %v714 = vadd.f32 %v493, %v713
  %715 = vmatmul.bf16.gmra.mxu0 %v562
  %v716 = vpop.f32.mrf.mxu0
  %v717 = vadd.f32 %v493, %v716
  %v718 = vpop.f32.mrf.mxu0
  %v719 = vadd.f32 %v493, %v718
  %720 = vmatmul.bf16.gmra.mxu0 %v565
  %v721 = vpop.f32.mrf.mxu0
  %v722 = vadd.f32 %v493, %v721
  %v723 = vpop.f32.mrf.mxu0
  %v724 = vadd.f32 %v493, %v723
  %725 = vmatmul.bf16.gmra.mxu0 %v568
  %v726 = vpop.f32.mrf.mxu0
  %v727 = vadd.f32 %v493, %v726
  %v728 = vpop.f32.mrf.mxu0
  %v729 = vadd.f32 %v493, %v728
  %730 = vmatmul.bf16.gmra.mxu0 %v571
  %v731 = vpop.f32.mrf.mxu0
  %v732 = vadd.f32 %v493, %v731
  %v733 = vpop.f32.mrf.mxu0
  %v734 = vadd.f32 %v493, %v733
  %735 = vmatmul.bf16.gmra.mxu0 %v574
  %v736 = vpop.f32.mrf.mxu0
  %v737 = vadd.f32 %v493, %v736
  %v738 = vpop.f32.mrf.mxu0
  %v739 = vadd.f32 %v493, %v738
  %740 = vmatmul.bf16.gmra.mxu0 %v577
  %v741 = vpop.f32.mrf.mxu0
  %v742 = vadd.f32 %v493, %v741
  %v743 = vpop.f32.mrf.mxu0
  %v744 = vadd.f32 %v493, %v743
  %745 = vmatmul.bf16.gmra.mxu0 %v580
  %v746 = vpop.f32.mrf.mxu0
  %v747 = vadd.f32 %v493, %v746
  %v748 = vpop.f32.mrf.mxu0
  %v749 = vadd.f32 %v493, %v748
  %750 = vmatmul.bf16.gmra.mxu0 %v583
  %v751 = vpop.f32.mrf.mxu0
  %v752 = vadd.f32 %v493, %v751
  %v753 = vpop.f32.mrf.mxu0
  %v754 = vadd.f32 %v493, %v753
  %755 = vmatmul.bf16.gmra.mxu0 %v586
  %v756 = vpop.f32.mrf.mxu0
  %v757 = vadd.f32 %v493, %v756
  %v758 = vpop.f32.mrf.mxu0
  %v759 = vadd.f32 %v493, %v758
  %760 = vmatmul.bf16.gmra.mxu0 %v589
  %v761 = vpop.f32.mrf.mxu0
  %v762 = vadd.f32 %v493, %v761
  %v763 = vpop.f32.mrf.mxu0
  %v764 = vadd.f32 %v493, %v763
  %765 = vdwg.mxu0
  %v766 = vtanh.pop %v607
  %v767 = vtanh.pop %v609
  %v768 = vtanh.pop %v612
  %v769 = vtanh.pop %v614
  %v770 = vtanh.pop %v617
  %v771 = vtanh.pop %v619
  %v772 = vtanh.pop %v622
  %v773 = vtanh.pop %v624
  %v774 = vtanh.pop %v627
  %v775 = vtanh.pop %v629
  %v776 = vtanh.pop %v632
  %v777 = vtanh.pop %v634
  %v778 = vtanh.pop %v637
  %v779 = vtanh.pop %v639
  %v780 = vtanh.pop %v642
  %v781 = vtanh.pop %v644
  %v782 = vtanh.pop %v647
  %v783 = vtanh.pop %v649
  %v784 = vtanh.pop %v652
  %v785 = vtanh.pop %v654
  %v786 = vtanh.pop %v657
  %v787 = vtanh.pop %v659
  %v788 = vtanh.pop %v662
  %v789 = vtanh.pop %v664
  %v790 = vtanh.pop %v667
  %v791 = vtanh.pop %v669
  %v792 = vtanh.pop %v672
  %v793 = vtanh.pop %v674
  %v794 = vtanh.pop %v677
  %v795 = vtanh.pop %v679
  %v796 = vtanh.pop %v682
  %v797 = vtanh.pop %v684
  %v798 = vtanh.pop %v687
  %v799 = vtanh.pop %v689
  %v800 = vtanh.pop %v692
  %v801 = vtanh.pop %v694
  %v802 = vtanh.pop %v697
  %v803 = vtanh.pop %v699
  %v804 = vtanh.pop %v702
  %v805 = vtanh.pop %v704
  %v806 = vtanh.pop %v707
  %v807 = vtanh.pop %v709
  %v808 = vtanh.pop %v712
  %v809 = vtanh.pop %v714
  %v810 = vtanh.pop %v717
  %v811 = vtanh.pop %v719
  %v812 = vtanh.pop %v722
  %v813 = vtanh.pop %v724
  %v814 = vtanh.pop %v727
  %v815 = vtanh.pop %v729
  %v816 = vtanh.pop %v732
  %v817 = vtanh.pop %v734
  %v818 = vtanh.pop %v737
  %v819 = vtanh.pop %v739
  %v820 = vtanh.pop %v742
  %v821 = vtanh.pop %v744
  %v822 = vtanh.pop %v747
  %v823 = vtanh.pop %v749
  %v824 = vtanh.pop %v752
  %v825 = vtanh.pop %v754
  %v826 = vtanh.pop %v757
  %v827 = vtanh.pop %v759
  %v828 = vtanh.pop %v762
  %v829 = vtanh.pop %v764
  %v830 = vpack.c.bf16 %v767, %v766
  %v831 = vpack.c.bf16 %v769, %v768
  %v832 = vpack.c.bf16 %v771, %v770
  %v833 = vpack.c.bf16 %v773, %v772
  %v834 = vpack.c.bf16 %v775, %v774
  %v835 = vpack.c.bf16 %v777, %v776
  %v836 = vpack.c.bf16 %v779, %v778
  %v837 = vpack.c.bf16 %v781, %v780
  %v838 = vpack.c.bf16 %v783, %v782
  %v839 = vpack.c.bf16 %v785, %v784
  %v840 = vpack.c.bf16 %v787, %v786
  %v841 = vpack.c.bf16 %v789, %v788
  %v842 = vpack.c.bf16 %v791, %v790
  %v843 = vpack.c.bf16 %v793, %v792
  %v844 = vpack.c.bf16 %v795, %v794
  %v845 = vpack.c.bf16 %v797, %v796
  %v846 = vpack.c.bf16 %v799, %v798
  %v847 = vpack.c.bf16 %v801, %v800
  %v848 = vpack.c.bf16 %v803, %v802
  %v849 = vpack.c.bf16 %v805, %v804
  %v850 = vpack.c.bf16 %v807, %v806
  %v851 = vpack.c.bf16 %v809, %v808
  %v852 = vpack.c.bf16 %v811, %v810
  %v853 = vpack.c.bf16 %v813, %v812
  %v854 = vpack.c.bf16 %v815, %v814
  %v855 = vpack.c.bf16 %v817, %v816
  %v856 = vpack.c.bf16 %v819, %v818
  %v857 = vpack.c.bf16 %v821, %v820
  %v858 = vpack.c.bf16 %v823, %v822
  %v859 = vpack.c.bf16 %v825, %v824
  %v860 = vpack.c.bf16 %v827, %v826
  %v861 = vpack.c.bf16 %v829, %v828
  %v862 = vpack.c.bf16 %v84, %v84
  %v863 = vperm.slane %v87, 0
  %v865 = vsel %vm494, %v830, 0
  %v868 = vsel %vm494, %v831, 0
  %v871 = vsel %vm494, %v832, 0
  %v874 = vsel %vm494, %v833, 0
  %v877 = vsel %vm494, %v834, 0
  %v880 = vsel %vm494, %v835, 0
  %v883 = vsel %vm494, %v836, 0
  %v886 = vsel %vm494, %v837, 0
  %v889 = vsel %vm494, %v838, 0
  %v892 = vsel %vm494, %v839, 0
  %v895 = vsel %vm494, %v840, 0
  %v898 = vsel %vm494, %v841, 0
  %v901 = vsel %vm494, %v842, 0
  %v904 = vsel %vm494, %v843, 0
  %v907 = vsel %vm494, %v844, 0
  %v910 = vsel %vm494, %v845, 0
  %v913 = vsel %vm494, %v846, 0
  %v916 = vsel %vm494, %v847, 0
  %v919 = vsel %vm494, %v848, 0
  %v922 = vsel %vm494, %v849, 0
  %v925 = vsel %vm494, %v850, 0
  %v928 = vsel %vm494, %v851, 0
  %v931 = vsel %vm494, %v852, 0
  %v934 = vsel %vm494, %v853, 0
  %v937 = vsel %vm494, %v854, 0
  %v940 = vsel %vm494, %v855, 0
  %v943 = vsel %vm494, %v856, 0
  %v946 = vsel %vm494, %v857, 0
  %v949 = vsel %vm494, %v858, 0
  %v952 = vsel %vm494, %v859, 0
  %v955 = vsel %vm494, %v860, 0
  %v958 = vsel %vm494, %v861, 0
  %v961 = vsel %vm494, %v862, 0
  %963 = vmatpush.bf16.xpose.msra.mxu0 0
  %964 = vmatpush.bf16.xpose.msra.mxu0 0
  %965 = vmatpush.bf16.xpose.msra.mxu0 0
  %966 = vmatpush.bf16.xpose.msra.mxu0 0
  %967 = vmatpush.bf16.xpose.msra.mxu0 0
  %968 = vmatpush.bf16.xpose.msra.mxu0 0
  %969 = vmatpush.bf16.xpose.msra.mxu0 0
  %970 = vmatpush.bf16.xpose.msra.mxu0 %v961
  %971 = vmatmul.bf16.gmra.mxu0 %v865
  %v972 = vpop.f32.mrf.mxu0
  %v973 = vadd.f32 %v863, %v972
  %v974 = vpop.f32.mrf.mxu0
  %v975 = vadd.f32 %v863, %v974
  %976 = vmatmul.bf16.gmra.mxu0 %v868
  %v977 = vpop.f32.mrf.mxu0
  %v978 = vadd.f32 %v863, %v977
  %v979 = vpop.f32.mrf.mxu0
  %v980 = vadd.f32 %v863, %v979
  %981 = vmatmul.bf16.gmra.mxu0 %v871
  %v982 = vpop.f32.mrf.mxu0
  %v983 = vadd.f32 %v863, %v982
  %v984 = vpop.f32.mrf.mxu0
  %v985 = vadd.f32 %v863, %v984
  %986 = vmatmul.bf16.gmra.mxu0 %v874
  %v987 = vpop.f32.mrf.mxu0
  %v988 = vadd.f32 %v863, %v987
  %v989 = vpop.f32.mrf.mxu0
  %v990 = vadd.f32 %v863, %v989
  %991 = vmatmul.bf16.gmra.mxu0 %v877
  %v992 = vpop.f32.mrf.mxu0
  %v993 = vadd.f32 %v863, %v992
  %v994 = vpop.f32.mrf.mxu0
  %v995 = vadd.f32 %v863, %v994
  %996 = vmatmul.bf16.gmra.mxu0 %v880
  %v997 = vpop.f32.mrf.mxu0
  %v998 = vadd.f32 %v863, %v997
  %v999 = vpop.f32.mrf.mxu0
  %v1000 = vadd.f32 %v863, %v999
  %1001 = vmatmul.bf16.gmra.mxu0 %v883
  %v1002 = vpop.f32.mrf.mxu0
  %v1003 = vadd.f32 %v863, %v1002
  %v1004 = vpop.f32.mrf.mxu0
  %v1005 = vadd.f32 %v863, %v1004
  %1006 = vmatmul.bf16.gmra.mxu0 %v886
  %v1007 = vpop.f32.mrf.mxu0
  %v1008 = vadd.f32 %v863, %v1007
  %v1009 = vpop.f32.mrf.mxu0
  %v1010 = vadd.f32 %v863, %v1009
  %1011 = vmatmul.bf16.gmra.mxu0 %v889
  %v1012 = vpop.f32.mrf.mxu0
  %v1013 = vadd.f32 %v863, %v1012
  %v1014 = vpop.f32.mrf.mxu0
  %v1015 = vadd.f32 %v863, %v1014
  %1016 = vmatmul.bf16.gmra.mxu0 %v892
  %v1017 = vpop.f32.mrf.mxu0
  %v1018 = vadd.f32 %v863, %v1017
  %v1019 = vpop.f32.mrf.mxu0
  %v1020 = vadd.f32 %v863, %v1019
  %1021 = vmatmul.bf16.gmra.mxu0 %v895
  %v1022 = vpop.f32.mrf.mxu0
  %v1023 = vadd.f32 %v863, %v1022
  %v1024 = vpop.f32.mrf.mxu0
  %v1025 = vadd.f32 %v863, %v1024
  %1026 = vmatmul.bf16.gmra.mxu0 %v898
  %v1027 = vpop.f32.mrf.mxu0
  %v1028 = vadd.f32 %v863, %v1027
  %v1029 = vpop.f32.mrf.mxu0
  %v1030 = vadd.f32 %v863, %v1029
  %1031 = vmatmul.bf16.gmra.mxu0 %v901
  %v1032 = vpop.f32.mrf.mxu0
  %v1033 = vadd.f32 %v863, %v1032
  %v1034 = vpop.f32.mrf.mxu0
  %v1035 = vadd.f32 %v863, %v1034
  %1036 = vmatmul.bf16.gmra.mxu0 %v904
  %v1037 = vpop.f32.mrf.mxu0
  %v1038 = vadd.f32 %v863, %v1037
  %v1039 = vpop.f32.mrf.mxu0
  %v1040 = vadd.f32 %v863, %v1039
  %1041 = vmatmul.bf16.gmra.mxu0 %v907
  %v1042 = vpop.f32.mrf.mxu0
  %v1043 = vadd.f32 %v863, %v1042
  %v1044 = vpop.f32.mrf.mxu0
  %v1045 = vadd.f32 %v863, %v1044
  %1046 = vmatmul.bf16.gmra.mxu0 %v910
  %v1047 = vpop.f32.mrf.mxu0
  %v1048 = vadd.f32 %v863, %v1047
  %v1049 = vpop.f32.mrf.mxu0
  %v1050 = vadd.f32 %v863, %v1049
  %1051 = vmatmul.bf16.gmra.mxu0 %v913
  %v1052 = vpop.f32.mrf.mxu0
  %v1053 = vadd.f32 %v863, %v1052
  %v1054 = vpop.f32.mrf.mxu0
  %v1055 = vadd.f32 %v863, %v1054
  %1056 = vmatmul.bf16.gmra.mxu0 %v916
  %v1057 = vpop.f32.mrf.mxu0
  %v1058 = vadd.f32 %v863, %v1057
  %v1059 = vpop.f32.mrf.mxu0
  %v1060 = vadd.f32 %v863, %v1059
  %1061 = vmatmul.bf16.gmra.mxu0 %v919
  %v1062 = vpop.f32.mrf.mxu0
  %v1063 = vadd.f32 %v863, %v1062
  %v1064 = vpop.f32.mrf.mxu0
  %v1065 = vadd.f32 %v863, %v1064
  %1066 = vmatmul.bf16.gmra.mxu0 %v922
  %v1067 = vpop.f32.mrf.mxu0
  %v1068 = vadd.f32 %v863, %v1067
  %v1069 = vpop.f32.mrf.mxu0
  %v1070 = vadd.f32 %v863, %v1069
  %1071 = vmatmul.bf16.gmra.mxu0 %v925
  %v1072 = vpop.f32.mrf.mxu0
  %v1073 = vadd.f32 %v863, %v1072
  %v1074 = vpop.f32.mrf.mxu0
  %v1075 = vadd.f32 %v863, %v1074
  %1076 = vmatmul.bf16.gmra.mxu0 %v928
  %v1077 = vpop.f32.mrf.mxu0
  %v1078 = vadd.f32 %v863, %v1077
  %v1079 = vpop.f32.mrf.mxu0
  %v1080 = vadd.f32 %v863, %v1079
  %1081 = vmatmul.bf16.gmra.mxu0 %v931
  %v1082 = vpop.f32.mrf.mxu0
  %v1083 = vadd.f32 %v863, %v1082
  %v1084 = vpop.f32.mrf.mxu0
  %v1085 = vadd.f32 %v863, %v1084
  %1086 = vmatmul.bf16.gmra.mxu0 %v934
  %v1087 = vpop.f32.mrf.mxu0
  %v1088 = vadd.f32 %v863, %v1087
  %v1089 = vpop.f32.mrf.mxu0
  %v1090 = vadd.f32 %v863, %v1089
  %1091 = vmatmul.bf16.gmra.mxu0 %v937
  %v1092 = vpop.f32.mrf.mxu0
  %v1093 = vadd.f32 %v863, %v1092
  %v1094 = vpop.f32.mrf.mxu0
  %v1095 = vadd.f32 %v863, %v1094
  %1096 = vmatmul.bf16.gmra.mxu0 %v940
  %v1097 = vpop.f32.mrf.mxu0
  %v1098 = vadd.f32 %v863, %v1097
  %v1099 = vpop.f32.mrf.mxu0
  %v1100 = vadd.f32 %v863, %v1099
  %1101 = vmatmul.bf16.gmra.mxu0 %v943
  %v1102 = vpop.f32.mrf.mxu0
  %v1103 = vadd.f32 %v863, %v1102
  %v1104 = vpop.f32.mrf.mxu0
  %v1105 = vadd.f32 %v863, %v1104
  %1106 = vmatmul.bf16.gmra.mxu0 %v946
  %v1107 = vpop.f32.mrf.mxu0
  %v1108 = vadd.f32 %v863, %v1107
  %v1109 = vpop.f32.mrf.mxu0
  %v1110 = vadd.f32 %v863, %v1109
  %1111 = vmatmul.bf16.gmra.mxu0 %v949
  %v1112 = vpop.f32.mrf.mxu0
  %v1113 = vadd.f32 %v863, %v1112
  %v1114 = vpop.f32.mrf.mxu0
  %v1115 = vadd.f32 %v863, %v1114
  %1116 = vmatmul.bf16.gmra.mxu0 %v952
  %v1117 = vpop.f32.mrf.mxu0
  %v1118 = vadd.f32 %v863, %v1117
  %v1119 = vpop.f32.mrf.mxu0
  %v1120 = vadd.f32 %v863, %v1119
  %1121 = vmatmul.bf16.gmra.mxu0 %v955
  %v1122 = vpop.f32.mrf.mxu0
  %v1123 = vadd.f32 %v863, %v1122
  %v1124 = vpop.f32.mrf.mxu0
  %v1125 = vadd.f32 %v863, %v1124
  %1126 = vmatmul.bf16.gmra.mxu0 %v958
  %v1127 = vpop.f32.mrf.mxu0
  %v1128 = vadd.f32 %v863, %v1127
  %v1129 = vpop.f32.mrf.mxu0
  %v1130 = vadd.f32 %v863, %v1129
  %1131 = vdwg.mxu0
  %1132 = vst.msk [vmem:[%s2] sm:$0xff] %vm123, %v973
  %1133 = vst.msk [vmem:[%s2 + $0x8] sm:$0xff] %vm123, %v975
  %1134 = vst.msk [vmem:[%s2 + $0x10] sm:$0xff] %vm123, %v978
  %1135 = vst.msk [vmem:[%s2 + $0x18] sm:$0xff] %vm123, %v980
  %1136 = vst.msk [vmem:[%s2 + $0x20] sm:$0xff] %vm123, %v983
  %1137 = vst.msk [vmem:[%s2 + $0x28] sm:$0xff] %vm123, %v985
  %1138 = vst.msk [vmem:[%s2 + $0x30] sm:$0xff] %vm123, %v988
  %1139 = vst.msk [vmem:[%s2 + $0x38] sm:$0xff] %vm123, %v990
  %1140 = vst.msk [vmem:[%s2 + $0x40] sm:$0xff] %vm123, %v993
  %1141 = vst.msk [vmem:[%s2 + $0x48] sm:$0xff] %vm123, %v995
  %1142 = vst.msk [vmem:[%s2 + $0x50] sm:$0xff] %vm123, %v998
  %1143 = vst.msk [vmem:[%s2 + $0x58] sm:$0xff] %vm123, %v1000
  %1144 = vst.msk [vmem:[%s2 + $0x60] sm:$0xff] %vm123, %v1003
  %1145 = vst.msk [vmem:[%s2 + $0x68] sm:$0xff] %vm123, %v1005
  %1146 = vst.msk [vmem:[%s2 + $0x70] sm:$0xff] %vm123, %v1008
  %1147 = vst.msk [vmem:[%s2 + $0x78] sm:$0xff] %vm123, %v1010
  %1148 = vst.msk [vmem:[%s2 + $0x80] sm:$0xff] %vm123, %v1013
  %1149 = vst.msk [vmem:[%s2 + $0x88] sm:$0xff] %vm123, %v1015
  %1150 = vst.msk [vmem:[%s2 + $0x90] sm:$0xff] %vm123, %v1018
  %1151 = vst.msk [vmem:[%s2 + $0x98] sm:$0xff] %vm123, %v1020
  %1152 = vst.msk [vmem:[%s2 + $0xa0] sm:$0xff] %vm123, %v1023
  %1153 = vst.msk [vmem:[%s2 + $0xa8] sm:$0xff] %vm123, %v1025
  %1154 = vst.msk [vmem:[%s2 + $0xb0] sm:$0xff] %vm123, %v1028
  %1155 = vst.msk [vmem:[%s2 + $0xb8] sm:$0xff] %vm123, %v1030
  %1156 = vst.msk [vmem:[%s2 + $0xc0] sm:$0xff] %vm123, %v1033
  %1157 = vst.msk [vmem:[%s2 + $0xc8] sm:$0xff] %vm123, %v1035
  %1158 = vst.msk [vmem:[%s2 + $0xd0] sm:$0xff] %vm123, %v1038
  %1159 = vst.msk [vmem:[%s2 + $0xd8] sm:$0xff] %vm123, %v1040
  %1160 = vst.msk [vmem:[%s2 + $0xe0] sm:$0xff] %vm123, %v1043
  %1161 = vst.msk [vmem:[%s2 + $0xe8] sm:$0xff] %vm123, %v1045
  %1162 = vst.msk [vmem:[%s2 + $0xf0] sm:$0xff] %vm123, %v1048
  %1163 = vst.msk [vmem:[%s2 + $0xf8] sm:$0xff] %vm123, %v1050
  %1164 = vst.msk [vmem:[%s2 + $0x100] sm:$0xff] %vm123, %v1053
  %1165 = vst.msk [vmem:[%s2 + $0x108] sm:$0xff] %vm123, %v1055
  %1166 = vst.msk [vmem:[%s2 + $0x110] sm:$0xff] %vm123, %v1058
  %1167 = vst.msk [vmem:[%s2 + $0x118] sm:$0xff] %vm123, %v1060
  %1168 = vst.msk [vmem:[%s2 + $0x120] sm:$0xff] %vm123, %v1063
  %1169 = vst.msk [vmem:[%s2 + $0x128] sm:$0xff] %vm123, %v1065
  %1170 = vst.msk [vmem:[%s2 + $0x130] sm:$0xff] %vm123, %v1068
  %1171 = vst.msk [vmem:[%s2 + $0x138] sm:$0xff] %vm123, %v1070
  %1172 = vst.msk [vmem:[%s2 + $0x140] sm:$0xff] %vm123, %v1073
  %1173 = vst.msk [vmem:[%s2 + $0x148] sm:$0xff] %vm123, %v1075
  %1174 = vst.msk [vmem:[%s2 + $0x150] sm:$0xff] %vm123, %v1078
  %1175 = vst.msk [vmem:[%s2 + $0x158] sm:$0xff] %vm123, %v1080
  %1176 = vst.msk [vmem:[%s2 + $0x160] sm:$0xff] %vm123, %v1083
  %1177 = vst.msk [vmem:[%s2 + $0x168] sm:$0xff] %vm123, %v1085
  %1178 = vst.msk [vmem:[%s2 + $0x170] sm:$0xff] %vm123, %v1088
  %1179 = vst.msk [vmem:[%s2 + $0x178] sm:$0xff] %vm123, %v1090
  %1180 = vst.msk [vmem:[%s2 + $0x180] sm:$0xff] %vm123, %v1093
  %1181 = vst.msk [vmem:[%s2 + $0x188] sm:$0xff] %vm123, %v1095
  %1182 = vst.msk [vmem:[%s2 + $0x190] sm:$0xff] %vm123, %v1098
  %1183 = vst.msk [vmem:[%s2 + $0x198] sm:$0xff] %vm123, %v1100
  %1184 = vst.msk [vmem:[%s2 + $0x1a0] sm:$0xff] %vm123, %v1103
  %1185 = vst.msk [vmem:[%s2 + $0x1a8] sm:$0xff] %vm123, %v1105
  %1186 = vst.msk [vmem:[%s2 + $0x1b0] sm:$0xff] %vm123, %v1108
  %1187 = vst.msk [vmem:[%s2 + $0x1b8] sm:$0xff] %vm123, %v1110
  %1188 = vst.msk [vmem:[%s2 + $0x1c0] sm:$0xff] %vm123, %v1113
  %1189 = vst.msk [vmem:[%s2 + $0x1c8] sm:$0xff] %vm123, %v1115
  %1190 = vst.msk [vmem:[%s2 + $0x1d0] sm:$0xff] %vm123, %v1118
  %1191 = vst.msk [vmem:[%s2 + $0x1d8] sm:$0xff] %vm123, %v1120
  %1192 = vst.msk [vmem:[%s2 + $0x1e0] sm:$0xff] %vm123, %v1123
  %1193 = vst.msk [vmem:[%s2 + $0x1e8] sm:$0xff] %vm123, %v1125
  %1194 = vst.msk [vmem:[%s2 + $0x1f0] sm:$0xff] %vm123, %v1128
  %1195 = vst.msk [vmem:[%s2 + $0x1f8] sm:$0xff] %vm123, %v1130
  // Predicated region
  $region10: #{connected_nn_forward.1} parent=0 // pred_check
    _
  $region11: #{connected_nn_forward.1} parent=0 // pred_check_branch
    %1197 = sbr.rel (0) target = $region13
  $region12: #{connected_nn_forward.1} parent=0 // pred_region
    _
  $region13: #{connected_nn_forward.1} parent=0 // pred_fallthru
    _
  // Predicated region
  $region14: #{connected_nn_forward.1} parent=0 // pred_check
    _
  $region15: #{connected_nn_forward.1} parent=0 // pred_check_branch
    %1199 = sbr.rel (0) target = $region17
  $region16: #{connected_nn_forward.1} parent=0 // pred_region
    _
  $region17: #{connected_nn_forward.1} parent=0 // pred_fallthru
    _

</llo_original>
